<compile_context>
chip_gen: v5e
topology: v5e:2x2
jax: 0.10.0
libtpu: 0.0.40
codegen_flags: <defaults>
</compile_context>

<pallas_src>
import numpy as np
import jax
import jax.numpy as jnp
from jax.experimental import pallas as pl
from jax.experimental.pallas import tpu as pltpu

try:  # optional; falls back to the in-script numpy Hungarian solver
    from scipy.optimize import linear_sum_assignment as _scipy_lsa
except Exception:  # pragma: no cover
    _scipy_lsa = None


# ----------------------------- Pallas kernel --------------------------------

def _make_cost_kernel(tile_q, w_class, w_bbox, w_giou, gather_first,
                      alpha=0.25, eps=1e-8, tiny=1e-9):
    # gamma == 2.0 in the reference module; use explicit squares (VPU) instead of
    # pow (which lowers to exp(gamma*log(p)) on the single EUP slot).
    wc_pos = float(w_class * alpha)
    wc_neg = float(w_class * (1.0 - alpha))
    wb = float(w_bbox)
    wg = float(w_giou)

    def cost_kernel(logits_ref, boxes_ref, onehot_ref, tgt_bbox_t_ref, c_ref):
        # logits_ref:     (TQ, C_pad)   f32
        # boxes_ref:      (N_pad, 4)    f32 cxcywh (grid-invariant, row-sliced here)
        # onehot_ref:     (C_pad, T_pad) f32 one-hot of target labels (grid-invariant)
        # tgt_bbox_t_ref: (4, T_pad)    f32 cxcywh transposed (grid-invariant)
        # c_ref:          (TQ, T_pad)   output cost tile

        # ---- focal class cost ------------------------------------------------
        if gather_first:
            # Exact gather of raw logits via one-hot matmul (MXU), then focal math
            # on the (TQ, T_pad) tile.  Padded target columns hit all-zero one-hot
            # columns -> gathered logit 0 -> garbage cost there, but those columns
            # are sliced off host-side.
            g = jnp.dot(logits_ref[...], onehot_ref[...],
                        preferred_element_type=jnp.float32)          # (TQ, T_pad)
            p = jax.nn.sigmoid(g)
            omp = 1.0 - p
            c = (wc_pos * (omp * omp) * (-jnp.log(p + eps))
                 - wc_neg * (p * p) * (-jnp.log(omp + eps)))
        else:
            # Used only when T_pad > C_pad (cheaper to do focal over classes).
            p = jax.nn.sigmoid(logits_ref[...])
            omp = 1.0 - p
            diff = (wc_pos * (omp * omp) * (-jnp.log(p + eps))
                    - wc_neg * (p * p) * (-jnp.log(omp + eps)))      # (TQ, C_pad)
            c = jnp.dot(diff, onehot_ref[...],
                        preferred_element_type=jnp.float32)          # (TQ, T_pad)

        # ---- box operands (narrow: (TQ,1) / (1,T_pad)) -------------------------
        row0 = pl.multiple_of(pl.program_id(0) * tile_q, 8)
        ob = boxes_ref[pl.ds(row0, tile_q), :]                       # (TQ, 4)
        tbt = tgt_bbox_t_ref[...]                                    # (4, T_pad)
        ocx, ocy, ow, oh = ob[:, 0:1], ob[:, 1:2], ob[:, 2:3], ob[:, 3:4]
        tcx, tcy, tw, th = tbt[0:1, :], tbt[1:2, :], tbt[2:3, :], tbt[3:4, :]

        # ---- L1 cdist, accumulated straight into c -----------------------------
        l1 = jnp.abs(ocx - tcx)
        l1 = l1 + jnp.abs(ocy - tcy)
        l1 = l1 + jnp.abs(ow - tw)
        l1 = l1 + jnp.abs(oh - th)
        c = c + wb * l1

        # ---- GIoU (consume full-tile temporaries as soon as possible) ----------
        ox0 = ocx - 0.5 * ow; oy0 = ocy - 0.5 * oh
        ox1 = ocx + 0.5 * ow; oy1 = ocy + 0.5 * oh
        tx0 = tcx - 0.5 * tw; ty0 = tcy - 0.5 * th
        tx1 = tcx + 0.5 * tw; ty1 = tcy + 0.5 * th

        inter = (jnp.maximum(jnp.minimum(ox1, tx1) - jnp.maximum(ox0, tx0), 0.0)
                 * jnp.maximum(jnp.minimum(oy1, ty1) - jnp.maximum(oy0, ty0), 0.0))
        union = ((ox1 - ox0) * (oy1 - oy0)            # (TQ,1)  narrow
                 + (tx1 - tx0) * (ty1 - ty0)           # (1,T_pad) narrow
                 - inter)
        area_c = ((jnp.maximum(ox1, tx1) - jnp.minimum(ox0, tx0))
                  * (jnp.maximum(oy1, ty1) - jnp.minimum(oy0, ty0)))

        # eps-guarded approx reciprocals (EUP-only; ~2^-12 rel err, ranking-safe)
        iou = inter * pl.reciprocal(jnp.maximum(union, tiny), approx=True)
        giou = iou - (area_c - union) * pl.reciprocal(jnp.maximum(area_c, tiny),
                                                      approx=True)
        c_ref[...] = c - wg * giou

    return cost_kernel


# ------------------------- tiling / VMEM accounting --------------------------

def _round_up(a, m):
    return (a + m - 1) // m * m


_LIVE_FULL_TILE_TEMPS = 16  # headroom for L1 + GIoU + focal full-size f32 temps


def _vmem_bytes(tile_q, n_pad, c_pad, t_pad, gather_first):
    io = (2 * tile_q * c_pad * 4       # logits blocks (double-buffered)
          + 2 * tile_q * t_pad * 4     # output blocks (double-buffered)
          + 2 * n_pad * 128 * 4        # boxes, lane-padded 4 -> 128, resident
          + 2 * c_pad * t_pad * 4      # one-hot (f32, grid-invariant)
          + 2 * 8 * t_pad * 4)         # target boxes, sublane-padded 4 -> 8
    temps = _LIVE_FULL_TILE_TEMPS * tile_q * t_pad * 4
    if not gather_first:
        temps += 6 * tile_q * c_pad * 4   # focal temps live over the class dim
    return io + temps


def _num_tensorcores_per_chip():
    # Best-effort: only v7x has 2 TensorCores per chip; default to 1 (v5e/v6e).
    try:
        kind = jax.devices()[0].device_kind.lower()
        if "v7" in kind or "tpu7" in kind or "7x" in kind:
            return 2
    except Exception:
        pass
    return 1


def _select_tiling(N, c_pad, t_pad, gather_first, num_tc,
                   budget_bytes=24 << 20, max_tile=1024):
    n8 = _round_up(N, 8)
    # Single-TC chips (v5e/v6e): one maximal tile when the problem fits -> zero
    # extra pipeline-step overhead.  On multi-TC chips (v7x) only take the
    # single-step path for tiny problems where overhead dominates anyway.
    if (n8 <= max_tile
            and _vmem_bytes(n8, n8, c_pad, t_pad, gather_first) <= budget_bytes
            and (num_tc == 1 or n8 <= 64)):
        return n8, n8, 1

    tile_q = 8
    for cand in (16, 32, 64, 128, 256, 512, 1024):
        if cand > max_tile:
            break
        if _vmem_bytes(cand, _round_up(N, cand), c_pad, t_pad,
                       gather_first) <= budget_bytes:
            tile_q = cand

    steps = max(num_tc, pl.cdiv(N, tile_q))
    # Step count a multiple of the TC count -> balanced megacore sharding (v7x).
    rem = steps % max(num_tc, 1)
    if rem:
        steps += max(num_tc, 1) - rem
    tile_q = _round_up(pl.cdiv(N, steps), 8)
    return tile_q, steps * tile_q, steps


# ------------------------------ cost matrix ----------------------------------

def pallas_cost_matrix(pred_logits, pred_boxes, tgt_ids, tgt_bbox,
                       w_class=1.0, w_bbox=1.0, w_giou=1.0):
    """Returns the (bs*num_queries, T) matching cost matrix, computed on TPU."""
    bs, nq, num_classes = pred_logits.shape
    N = bs * nq
    T = int(tgt_ids.shape[0])
    if T == 0:
        # No targets anywhere: nothing to match; avoid zero-width lane dim in kernel.
        return jnp.zeros((N, 0), jnp.float32)

    # Lane-dense padding of class / target dims.
    C_pad = _round_up(num_classes, 128)
    T_pad = _round_up(T, 128)
    gather_first = C_pad >= T_pad   # gather-then-focal unless targets outnumber classes

    num_tc = _num_tensorcores_per_chip()
    tile_q, N_pad, steps = _select_tiling(N, C_pad, T_pad, gather_first, num_tc)

    # TODO(synk): if the model emits bf16 logits, ship them bf16 and gather in bf16
    # to halve the dominant HBM read (mainly a v5e bandwidth win); f32 kept here.
    logits = pred_logits.reshape(N, num_classes).astype(jnp.float32)
    logits = jnp.pad(logits, ((0, N_pad - N), (0, C_pad - num_classes)))
    boxes = pred_boxes.reshape(N, 4).astype(jnp.float32)
    boxes = jnp.pad(boxes, ((0, N_pad - N), (0, 0)))

    # f32 one-hot from the host (tiny, grid-invariant): exact gather, no per-step cast.
    onehot = jax.nn.one_hot(tgt_ids, C_pad, dtype=jnp.float32).T          # (C_pad, T)
    onehot = jnp.pad(onehot, ((0, 0), (0, T_pad - T)))
    tgt_bbox_t = jnp.pad(tgt_bbox.astype(jnp.float32).T,
                         ((0, 0), (0, T_pad - T)))                         # (4, T_pad)

    need = _vmem_bytes(tile_q, N_pad, C_pad, T_pad, gather_first)
    vmem_limit = int(min(48 << 20, max(16 << 20, need + (4 << 20))))

    kernel = _make_cost_kernel(tile_q, w_class, w_bbox, w_giou, gather_first)
    out = pl.pallas_call(
        kernel,
        out_shape=jax.ShapeDtypeStruct((N_pad, T_pad), jnp.float32),
        grid_spec=pltpu.PrefetchScalarGridSpec(
            num_scalar_prefetch=0,
            grid=(steps,),
            in_specs=[
                pl.BlockSpec((tile_q, C_pad), lambda i: (i, 0)),
                pl.BlockSpec((N_pad, 4), lambda i: (0, 0)),       # grid-invariant
                pl.BlockSpec((C_pad, T_pad), lambda i: (0, 0)),   # grid-invariant
                pl.BlockSpec((4, T_pad), lambda i: (0, 0)),       # grid-invariant
            ],
            out_specs=pl.BlockSpec((tile_q, T_pad), lambda i: (i, 0)),
        ),
        compiler_params=pltpu.CompilerParams(
            dimension_semantics=("parallel",),
            vmem_limit_bytes=vmem_limit),
    )(logits, boxes, onehot, tgt_bbox_t)
    return out[:N, :T]


# ------------------ host-side linear_sum_assignment (Hungarian) --------------
# TODO(synk): the Hungarian assignment is inherently sequential / data-dependent;
# it runs host-side (scipy if available, else numpy), not in Pallas.

def linear_sum_assignment_np(cost):
    cost = np.asarray(cost, dtype=np.float64)
    if cost.size == 0 or cost.shape[0] == 0 or cost.shape[1] == 0:
        return np.zeros((0,), np.int64), np.zeros((0,), np.int64)
    transposed = False
    if cost.shape[0] > cost.shape[1]:
        cost = cost.T
        transposed = True
    n, m = cost.shape  # n <= m
    INF = float("inf")
    u = np.zeros(n + 1)
    v = np.zeros(m + 1)
    p = np.zeros(m + 1, dtype=np.int64)
    way = np.zeros(m + 1, dtype=np.int64)
    for i in range(1, n + 1):
        p[0] = i
        j0 = 0
        minv = np.full(m + 1, INF)
        used = np.zeros(m + 1, dtype=bool)
        while True:
            used[j0] = True
            i0 = p[j0]
            delta = INF
            j1 = -1
            for j in range(1, m + 1):
                if not used[j]:
                    cur = cost[i0 - 1, j - 1] - u[i0] - v[j]
                    if cur < minv[j]:
                        minv[j] = cur
                        way[j] = j0
                    if minv[j] < delta:
                        delta = minv[j]
                        j1 = j
            for j in range(m + 1):
                if used[j]:
                    u[p[j]] += delta
                    v[j] -= delta
                else:
                    minv[j] -= delta
            j0 = j1
            if p[j0] == 0:
                break
        while True:
            j1 = way[j0]
            p[j0] = p[j1]
            j0 = j1
            if j0 == 0:
                break
    rows, cols = [], []
    for j in range(1, m + 1):
        if p[j] != 0:
            rows.append(p[j] - 1)
            cols.append(j - 1)
    rows = np.asarray(rows, dtype=np.int64)
    cols = np.asarray(cols, dtype=np.int64)
    if transposed:
        rows, cols = cols, rows
    order = np.argsort(rows, kind="stable")
    return rows[order], cols[order]


def linear_sum_assignment(cost):
    if _scipy_lsa is not None:
        r, c = _scipy_lsa(np.asarray(cost, dtype=np.float64))
        return np.asarray(r, np.int64), np.asarray(c, np.int64)
    return linear_sum_assignment_np(cost)


# ------------------------------ matcher wrapper ------------------------------

class HungarianMatcherJAX:
    def __init__(self, cost_class=1.0, cost_bbox=1.0, cost_giou=1.0, cost_ids=1.0):
        assert cost_class != 0 or cost_bbox != 0 or cost_giou != 0 or cost_ids != 0
        self.cost_class = cost_class
        self.cost_bbox = cost_bbox
        self.cost_giou = cost_giou
        self.cost_ids = cost_ids  # unused in forward (mirrors reference module)

    def __call__(self, outputs, targets):
        # TODO(synk): is_next / ref_indices masking branch (inf-masking of previously
        # matched rows/cols) is not exercised here; only the default path is implemented.
        pred_logits = outputs["pred_logits"]
        pred_boxes = outputs["pred_boxes"]
        bs, nq = pred_logits.shape[:2]
        tgt_ids = jnp.concatenate([v["labels"] for v in targets])
        tgt_bbox = jnp.concatenate([v["boxes"] for v in targets])
        sizes = [int(v["boxes"].shape[0]) for v in targets]

        if sum(sizes) == 0:
            return [(np.zeros((0,), np.int64), np.zeros((0,), np.int64)) for _ in targets]

        C = pallas_cost_matrix(pred_logits, pred_boxes, tgt_ids, tgt_bbox,
                               self.cost_class, self.cost_bbox, self.cost_giou)
        C = jax.block_until_ready(C)
        C_np = np.asarray(C).reshape(bs, nq, -1)
        indices = []
        offset = 0
        for b, s in enumerate(sizes):
            sub = C_np[b, :, offset:offset + s]
            i, j = linear_sum_assignment(sub)
            indices.append((i.astype(np.int64), j.astype(np.int64)))
            offset += s
        return indices


# ------------------------------- reference -----------------------------------

def _ref_cost_matrix(logits, boxes, tgt_ids, tgt_bbox, wc, wb, wg):
    logits = np.asarray(logits, np.float64).reshape(-1, logits.shape[-1])
    boxes = np.asarray(boxes, np.float64).reshape(-1, 4)
    tgt_ids = np.asarray(tgt_ids)
    tgt_bbox = np.asarray(tgt_bbox, np.float64)
    p = 1.0 / (1.0 + np.exp(-logits))
    alpha, gamma = 0.25, 2.0
    neg = (1 - alpha) * p ** gamma * (-np.log(1 - p + 1e-8))
    pos = alpha * (1 - p) ** gamma * (-np.log(p + 1e-8))
    cost_class = pos[:, tgt_ids] - neg[:, tgt_ids]
    cost_bbox = np.abs(boxes[:, None, :] - tgt_bbox[None, :, :]).sum(-1)

    def to_xyxy(b):
        cx, cy, w, h = b[:, 0], b[:, 1], b[:, 2], b[:, 3]
        return np.stack([cx - w / 2, cy - h / 2, cx + w / 2, cy + h / 2], -1)

    b1, b2 = to_xyxy(boxes), to_xyxy(tgt_bbox)
    a1 = (b1[:, 2] - b1[:, 0]) * (b1[:, 3] - b1[:, 1])
    a2 = (b2[:, 2] - b2[:, 0]) * (b2[:, 3] - b2[:, 1])
    lt = np.maximum(b1[:, None, :2], b2[None, :, :2])
    rb = np.minimum(b1[:, None, 2:], b2[None, :, 2:])
    wh = np.clip(rb - lt, 0, None)
    inter = wh[..., 0] * wh[..., 1]
    union = a1[:, None] + a2[None, :] - inter
    iou = inter / union
    ltc = np.minimum(b1[:, None, :2], b2[None, :, :2])
    rbc = np.maximum(b1[:, None, 2:], b2[None, :, 2:])
    whc = np.clip(rbc - ltc, 0, None)
    areac = whc[..., 0] * whc[..., 1]
    giou = iou - (areac - union) / areac
    return wb * cost_bbox + wc * cost_class + wg * (-giou)


# --------------------------------- main ---------------------------------------

if __name__ == "__main__":
    bs, num_queries, num_classes = 2, 16, 32
    sizes = [3, 5]

    key = jax.random.PRNGKey(0)
    k1, k2, k3, k4, k5 = jax.random.split(key, 5)
    pred_logits = jax.random.normal(k1, (bs, num_queries, num_classes), jnp.float32)
    pred_boxes = jnp.concatenate(
        [jax.random.uniform(k2, (bs, num_queries, 2), minval=0.2, maxval=0.8),
         jax.random.uniform(k3, (bs, num_queries, 2), minval=0.1, maxval=0.3)], axis=-1)

    labels_all = jax.random.randint(k4, (sum(sizes),), 0, num_classes)
    boxes_all = jnp.concatenate(
        [jax.random.uniform(k5, (sum(sizes), 2), minval=0.2, maxval=0.8),
         jax.random.uniform(k5, (sum(sizes), 2), minval=0.1, maxval=0.3)], axis=-1)

    targets = []
    off = 0
    for s in sizes:
        targets.append({"labels": labels_all[off:off + s],
                        "boxes": boxes_all[off:off + s],
                        "ids": labels_all[off:off + s]})
        off += s

    matcher = HungarianMatcherJAX(cost_class=1.0, cost_bbox=1.0, cost_giou=1.0, cost_ids=1.0)
    outputs = {"pred_logits": pred_logits, "pred_boxes": pred_boxes}
    indices = matcher(outputs, targets)

    # correctness check of the Pallas-computed cost matrix vs a numpy reference
    # (tolerance 2e-3 because of the approx-reciprocal GIoU divides)
    C = pallas_cost_matrix(pred_logits, pred_boxes, labels_all, boxes_all,
                           1.0, 1.0, 1.0)
    C = jax.block_until_ready(C)
    C_np = np.asarray(C).reshape(bs, num_queries, -1)
    C_ref = _ref_cost_matrix(np.asarray(pred_logits), np.asarray(pred_boxes),
                             np.asarray(labels_all), np.asarray(boxes_all),
                             1.0, 1.0, 1.0).reshape(bs, num_queries, -1)
    assert np.allclose(C_np, C_ref, rtol=2e-3, atol=2e-3), "cost matrix mismatch"
    for (i, j), s in zip(indices, sizes):
        assert len(i) == len(j) == min(num_queries, s)

    print("KERNEL_OK")
</pallas_src>

<mosaic_0001>
module attributes {stable_mosaic.version = 11 : i64} {
  func.func @cost_kernel(%arg0: i32, %arg1: memref<32x128xf32, #tpu.memory_space<vmem>>, %arg2: memref<32x4xf32, #tpu.memory_space<vmem>>, %arg3: memref<128x128xf32, #tpu.memory_space<vmem>>, %arg4: memref<4x128xf32, #tpu.memory_space<vmem>>, %arg5: memref<32x128xf32, #tpu.memory_space<vmem>>) attributes {dimension_semantics = [#tpu.dimension_semantics<parallel>], iteration_bounds = array<i64: 1>, scalar_prefetch = 0 : i64, scratch_operands = 0 : i64, tpu.core_type = #tpu.core_type<tc>, window_params = [{transform_indices = @transform_0, window_bounds = array<i64: 32, 128>}, {pipeline_mode = #tpu.pipeline_mode<synchronous>, transform_indices = @transform_1, window_bounds = array<i64: 32, 4>}, {pipeline_mode = #tpu.pipeline_mode<synchronous>, transform_indices = @transform_2, window_bounds = array<i64: 128, 128>}, {pipeline_mode = #tpu.pipeline_mode<synchronous>, transform_indices = @transform_3, window_bounds = array<i64: 4, 128>}, {transform_indices = @transform_4, window_bounds = array<i64: 32, 128>}]} {
    %c0 = arith.constant 0 : index
    %c0_0 = arith.constant 0 : index
    %0 = vector.load %arg1[%c0, %c0_0] : memref<32x128xf32, #tpu.memory_space<vmem>>, vector<32x128xf32>
    %c0_1 = arith.constant 0 : index
    %c0_2 = arith.constant 0 : index
    %1 = vector.load %arg3[%c0_1, %c0_2] : memref<128x128xf32, #tpu.memory_space<vmem>>, vector<128x128xf32>
    %cst = arith.constant dense<0.000000e+00> : vector<32x128xf32>
    %2 = tpu.matmul %0, %1, %cst {dimension_numbers = #tpu.dot_dimension_numbers<[1], [0], [0], [1], [0, 0, 1, 1], [], []>} : vector<32x128xf32>, vector<128x128xf32>, vector<32x128xf32> -> vector<32x128xf32>
    %3 = arith.negf %2 : vector<32x128xf32>
    %4 = math.exp %3 : vector<32x128xf32>
    %cst_3 = arith.constant 1.000000e+00 : f32
    %5 = vector.broadcast %cst_3 : f32 to vector<32x128xf32>
    %6 = arith.addf %5, %4 : vector<32x128xf32>
    %7 = arith.divf %5, %6 : vector<32x128xf32>
    %cst_4 = arith.constant 1.000000e+00 : f32
    %8 = vector.broadcast %cst_4 : f32 to vector<32x128xf32>
    %9 = arith.subf %8, %7 : vector<32x128xf32>
    %10 = arith.mulf %9, %9 : vector<32x128xf32>
    %cst_5 = arith.constant 2.500000e-01 : f32
    %11 = vector.broadcast %cst_5 : f32 to vector<32x128xf32>
    %12 = arith.mulf %11, %10 : vector<32x128xf32>
    %cst_6 = arith.constant 9.99999993E-9 : f32
    %13 = vector.broadcast %cst_6 : f32 to vector<32x128xf32>
    %14 = arith.addf %7, %13 : vector<32x128xf32>
    %15 = math.log %14 : vector<32x128xf32>
    %cst_7 = arith.constant 0.000000e+00 : f32
    %16 = vector.broadcast %cst_7 : f32 to vector<32x128xf32>
    %17 = arith.subf %16, %15 : vector<32x128xf32>
    %18 = arith.mulf %12, %17 : vector<32x128xf32>
    %19 = arith.mulf %7, %7 : vector<32x128xf32>
    %cst_8 = arith.constant 7.500000e-01 : f32
    %20 = vector.broadcast %cst_8 : f32 to vector<32x128xf32>
    %21 = arith.mulf %20, %19 : vector<32x128xf32>
    %cst_9 = arith.constant 9.99999993E-9 : f32
    %22 = vector.broadcast %cst_9 : f32 to vector<32x128xf32>
    %23 = arith.addf %9, %22 : vector<32x128xf32>
    %24 = math.log %23 : vector<32x128xf32>
    %cst_10 = arith.constant 0.000000e+00 : f32
    %25 = vector.broadcast %cst_10 : f32 to vector<32x128xf32>
    %26 = arith.subf %25, %24 : vector<32x128xf32>
    %27 = arith.mulf %21, %26 : vector<32x128xf32>
    %28 = arith.subf %18, %27 : vector<32x128xf32>
    %c32_i32 = arith.constant 32 : i32
    %29 = arith.muli %arg0, %c32_i32 : i32
    %30 = tpu.assume_multiple %29, 8 : i32
    %31 = arith.index_cast %30 : i32 to index
    %c0_11 = arith.constant 0 : index
    %32 = vector.load %arg2[%31, %c0_11] : memref<32x4xf32, #tpu.memory_space<vmem>>, vector<32x4xf32>
    %c0_12 = arith.constant 0 : index
    %c0_13 = arith.constant 0 : index
    %33 = vector.load %arg4[%c0_12, %c0_13] : memref<4x128xf32, #tpu.memory_space<vmem>>, vector<4x128xf32>
    %34 = vector.extract_strided_slice %32 {offsets = [0, 0], sizes = [32, 1], strides = [1, 1]} : vector<32x4xf32> to vector<32x1xf32>
    %35 = vector.extract_strided_slice %32 {offsets = [0, 1], sizes = [32, 1], strides = [1, 1]} : vector<32x4xf32> to vector<32x1xf32>
    %36 = vector.extract_strided_slice %32 {offsets = [0, 2], sizes = [32, 1], strides = [1, 1]} : vector<32x4xf32> to vector<32x1xf32>
    %37 = vector.extract_strided_slice %32 {offsets = [0, 3], sizes = [32, 1], strides = [1, 1]} : vector<32x4xf32> to vector<32x1xf32>
    %38 = vector.extract_strided_slice %33 {offsets = [0, 0], sizes = [1, 128], strides = [1, 1]} : vector<4x128xf32> to vector<1x128xf32>
    %39 = vector.extract_strided_slice %33 {offsets = [1, 0], sizes = [1, 128], strides = [1, 1]} : vector<4x128xf32> to vector<1x128xf32>
    %40 = vector.extract_strided_slice %33 {offsets = [2, 0], sizes = [1, 128], strides = [1, 1]} : vector<4x128xf32> to vector<1x128xf32>
    %41 = vector.extract_strided_slice %33 {offsets = [3, 0], sizes = [1, 128], strides = [1, 1]} : vector<4x128xf32> to vector<1x128xf32>
    %42 = vector.broadcast %34 : vector<32x1xf32> to vector<32x128xf32>
    %43 = vector.broadcast %38 : vector<1x128xf32> to vector<32x128xf32>
    %44 = arith.subf %42, %43 : vector<32x128xf32>
    %45 = math.absf %44 : vector<32x128xf32>
    %46 = vector.broadcast %35 : vector<32x1xf32> to vector<32x128xf32>
    %47 = vector.broadcast %39 : vector<1x128xf32> to vector<32x128xf32>
    %48 = arith.subf %46, %47 : vector<32x128xf32>
    %49 = math.absf %48 : vector<32x128xf32>
    %50 = arith.addf %45, %49 : vector<32x128xf32>
    %51 = vector.broadcast %36 : vector<32x1xf32> to vector<32x128xf32>
    %52 = vector.broadcast %40 : vector<1x128xf32> to vector<32x128xf32>
    %53 = arith.subf %51, %52 : vector<32x128xf32>
    %54 = math.absf %53 : vector<32x128xf32>
    %55 = arith.addf %50, %54 : vector<32x128xf32>
    %56 = vector.broadcast %37 : vector<32x1xf32> to vector<32x128xf32>
    %57 = vector.broadcast %41 : vector<1x128xf32> to vector<32x128xf32>
    %58 = arith.subf %56, %57 : vector<32x128xf32>
    %59 = math.absf %58 : vector<32x128xf32>
    %60 = arith.addf %55, %59 : vector<32x128xf32>
    %cst_14 = arith.constant 1.000000e+00 : f32
    %61 = vector.broadcast %cst_14 : f32 to vector<32x128xf32>
    %62 = arith.mulf %61, %60 : vector<32x128xf32>
    %63 = arith.addf %28, %62 : vector<32x128xf32>
    %cst_15 = arith.constant 5.000000e-01 : f32
    %64 = vector.broadcast %cst_15 : f32 to vector<32x1xf32>
    %65 = arith.mulf %64, %36 : vector<32x1xf32>
    %66 = arith.subf %34, %65 : vector<32x1xf32>
    %cst_16 = arith.constant 5.000000e-01 : f32
    %67 = vector.broadcast %cst_16 : f32 to vector<32x1xf32>
    %68 = arith.mulf %67, %37 : vector<32x1xf32>
    %69 = arith.subf %35, %68 : vector<32x1xf32>
    %cst_17 = arith.constant 5.000000e-01 : f32
    %70 = vector.broadcast %cst_17 : f32 to vector<32x1xf32>
    %71 = arith.mulf %70, %36 : vector<32x1xf32>
    %72 = arith.addf %34, %71 : vector<32x1xf32>
    %cst_18 = arith.constant 5.000000e-01 : f32
    %73 = vector.broadcast %cst_18 : f32 to vector<32x1xf32>
    %74 = arith.mulf %73, %37 : vector<32x1xf32>
    %75 = arith.addf %35, %74 : vector<32x1xf32>
    %cst_19 = arith.constant 5.000000e-01 : f32
    %76 = vector.broadcast %cst_19 : f32 to vector<1x128xf32>
    %77 = arith.mulf %76, %40 : vector<1x128xf32>
    %78 = arith.subf %38, %77 : vector<1x128xf32>
    %cst_20 = arith.constant 5.000000e-01 : f32
    %79 = vector.broadcast %cst_20 : f32 to vector<1x128xf32>
    %80 = arith.mulf %79, %41 : vector<1x128xf32>
    %81 = arith.subf %39, %80 : vector<1x128xf32>
    %cst_21 = arith.constant 5.000000e-01 : f32
    %82 = vector.broadcast %cst_21 : f32 to vector<1x128xf32>
    %83 = arith.mulf %82, %40 : vector<1x128xf32>
    %84 = arith.addf %38, %83 : vector<1x128xf32>
    %cst_22 = arith.constant 5.000000e-01 : f32
    %85 = vector.broadcast %cst_22 : f32 to vector<1x128xf32>
    %86 = arith.mulf %85, %41 : vector<1x128xf32>
    %87 = arith.addf %39, %86 : vector<1x128xf32>
    %88 = vector.broadcast %72 : vector<32x1xf32> to vector<32x128xf32>
    %89 = vector.broadcast %84 : vector<1x128xf32> to vector<32x128xf32>
    %90 = arith.minimumf %88, %89 : vector<32x128xf32>
    %91 = vector.broadcast %66 : vector<32x1xf32> to vector<32x128xf32>
    %92 = vector.broadcast %78 : vector<1x128xf32> to vector<32x128xf32>
    %93 = arith.maximumf %91, %92 : vector<32x128xf32>
    %94 = arith.subf %90, %93 : vector<32x128xf32>
    %cst_23 = arith.constant 0.000000e+00 : f32
    %95 = vector.broadcast %cst_23 : f32 to vector<32x128xf32>
    %96 = arith.maximumf %94, %95 : vector<32x128xf32>
    %97 = vector.broadcast %75 : vector<32x1xf32> to vector<32x128xf32>
    %98 = vector.broadcast %87 : vector<1x128xf32> to vector<32x128xf32>
    %99 = arith.minimumf %97, %98 : vector<32x128xf32>
    %100 = vector.broadcast %69 : vector<32x1xf32> to vector<32x128xf32>
    %101 = vector.broadcast %81 : vector<1x128xf32> to vector<32x128xf32>
    %102 = arith.maximumf %100, %101 : vector<32x128xf32>
    %103 = arith.subf %99, %102 : vector<32x128xf32>
    %cst_24 = arith.constant 0.000000e+00 : f32
    %104 = vector.broadcast %cst_24 : f32 to vector<32x128xf32>
    %105 = arith.maximumf %103, %104 : vector<32x128xf32>
    %106 = arith.mulf %96, %105 : vector<32x128xf32>
    %107 = arith.subf %72, %66 : vector<32x1xf32>
    %108 = arith.subf %75, %69 : vector<32x1xf32>
    %109 = arith.mulf %107, %108 : vector<32x1xf32>
    %110 = arith.subf %84, %78 : vector<1x128xf32>
    %111 = arith.subf %87, %81 : vector<1x128xf32>
    %112 = arith.mulf %110, %111 : vector<1x128xf32>
    %113 = vector.broadcast %109 : vector<32x1xf32> to vector<32x128xf32>
    %114 = vector.broadcast %112 : vector<1x128xf32> to vector<32x128xf32>
    %115 = arith.addf %113, %114 : vector<32x128xf32>
    %116 = arith.subf %115, %106 : vector<32x128xf32>
    %117 = vector.broadcast %72 : vector<32x1xf32> to vector<32x128xf32>
    %118 = vector.broadcast %84 : vector<1x128xf32> to vector<32x128xf32>
    %119 = arith.maximumf %117, %118 : vector<32x128xf32>
    %120 = vector.broadcast %66 : vector<32x1xf32> to vector<32x128xf32>
    %121 = vector.broadcast %78 : vector<1x128xf32> to vector<32x128xf32>
    %122 = arith.minimumf %120, %121 : vector<32x128xf32>
    %123 = arith.subf %119, %122 : vector<32x128xf32>
    %124 = vector.broadcast %75 : vector<32x1xf32> to vector<32x128xf32>
    %125 = vector.broadcast %87 : vector<1x128xf32> to vector<32x128xf32>
    %126 = arith.maximumf %124, %125 : vector<32x128xf32>
    %127 = vector.broadcast %69 : vector<32x1xf32> to vector<32x128xf32>
    %128 = vector.broadcast %81 : vector<1x128xf32> to vector<32x128xf32>
    %129 = arith.minimumf %127, %128 : vector<32x128xf32>
    %130 = arith.subf %126, %129 : vector<32x128xf32>
    %131 = arith.mulf %123, %130 : vector<32x128xf32>
    %cst_25 = arith.constant 9.99999971E-10 : f32
    %132 = vector.broadcast %cst_25 : f32 to vector<32x128xf32>
    %133 = arith.maximumf %116, %132 : vector<32x128xf32>
    %134 = tpu.reciprocal %133 {approx = true} : vector<32x128xf32> -> vector<32x128xf32>
    %135 = arith.mulf %106, %134 : vector<32x128xf32>
    %136 = arith.subf %131, %116 : vector<32x128xf32>
    %cst_26 = arith.constant 9.99999971E-10 : f32
    %137 = vector.broadcast %cst_26 : f32 to vector<32x128xf32>
    %138 = arith.maximumf %131, %137 : vector<32x128xf32>
    %139 = tpu.reciprocal %138 {approx = true} : vector<32x128xf32> -> vector<32x128xf32>
    %140 = arith.mulf %136, %139 : vector<32x128xf32>
    %141 = arith.subf %135, %140 : vector<32x128xf32>
    %cst_27 = arith.constant 1.000000e+00 : f32
    %142 = vector.broadcast %cst_27 : f32 to vector<32x128xf32>
    %143 = arith.mulf %142, %141 : vector<32x128xf32>
    %144 = arith.subf %63, %143 : vector<32x128xf32>
    %c0_28 = arith.constant 0 : index
    %c0_29 = arith.constant 0 : index
    %145 = vector.load %arg5[%c0_28, %c0_29] : memref<32x128xf32, #tpu.memory_space<vmem>>, vector<32x128xf32>
    tpu.vector_store %arg5[%c0_28, %c0_29], %144 {strides = array<i32>} : memref<32x128xf32, #tpu.memory_space<vmem>>, vector<32x128xf32>,
    return
  }
  func.func @transform_0(%arg0: i32) -> (i32, i32) {
    %c0_i32 = arith.constant 0 : i32
    %c0_i32_0 = arith.constant 0 : i32
    return %arg0, %c0_i32 : i32, i32
  }
  func.func @transform_1(%arg0: i32) -> (i32, i32) {
    %c0_i32 = arith.constant 0 : i32
    %c0_i32_0 = arith.constant 0 : i32
    %c0_i32_1 = arith.constant 0 : i32
    return %c0_i32, %c0_i32_0 : i32, i32
  }
  func.func @transform_2(%arg0: i32) -> (i32, i32) {
    %c0_i32 = arith.constant 0 : i32
    %c0_i32_0 = arith.constant 0 : i32
    %c0_i32_1 = arith.constant 0 : i32
    return %c0_i32, %c0_i32_0 : i32, i32
  }
  func.func @transform_3(%arg0: i32) -> (i32, i32) {
    %c0_i32 = arith.constant 0 : i32
    %c0_i32_0 = arith.constant 0 : i32
    %c0_i32_1 = arith.constant 0 : i32
    return %c0_i32, %c0_i32_0 : i32, i32
  }
  func.func @transform_4(%arg0: i32) -> (i32, i32) {
    %c0_i32 = arith.constant 0 : i32
    %c0_i32_0 = arith.constant 0 : i32
    return %arg0, %c0_i32 : i32, i32
  }
}

</mosaic_0001>

<llo_original>
// kernel: tpu_custom_call.1
$region0: #{tpu_custom_call.1}
  #allocation0 [shape = 'u32[]', space=smem, size = 0x4, offset = 0x4, fixed_abs, tag = 'smem constant byte address 0x4 - core index']
  #allocation1 [shape = 'u32[72,128]{1,0:T(1,128)}', space=vmem, size = 0x9000, scoped, tag = 'internal scratch']
  %s0 = inlined_call_operand.vmem [shape: f32[32,128], index: 0, kind: input, shape index: {}]
  %s1 = inlined_call_operand.vmem [shape: f32[32,4], index: 1, kind: input, shape index: {}]
  %s2 = inlined_call_operand.hbm [shape: f32[128,128], index: 2, kind: input, shape index: {}]
  %s3 = inlined_call_operand.vmem [shape: f32[4,128], index: 3, kind: input, shape index: {}]
  %s4 = inlined_call_operand.hbm [shape: f32[32,128], index: 4, kind: output, shape index: {}]
  %s5 = sld [smem:[#allocation0]]
  $region30: #{tpu_custom_call.1} parent=0
    _
  %s7 = ssub.s32 1, %s5
  %s8 = scalar_select 0, %s7, %s5
  $region1: #{tpu_custom_call.1} parent=0
    #allocation2 [shape = 'u8[65536]{0}', space=vmem, size = 0x10000, scoped, tag = 'input window, operand 2, single buffered']
    #allocation3 [shape = 's32[1]{0}', space=sflag, size = 0x4, scoped, tag = 'scoped memory for tpu_custom_call.1']
    #allocation4 [shape = 's32[1]{0}', space=sflag, size = 0x4, scoped, tag = 'scoped memory for tpu_custom_call.1']
    #allocation5 [shape = 'u8[16384]{0}', space=vmem, size = 0x4000, scoped, tag = 'output window, operand 0, single buffered']
    %9 = vsyncpa [#allocation3], 0
    %10 = vsyncpa [#allocation4], 0
    // Predicated region
    $region2: #{tpu_custom_call.1} parent=1 // pred_check
      _
    $region3: #{tpu_custom_call.1} parent=1 // pred_check_branch
      %12 = sbr.rel (0) target = $region5
    $region4: #{tpu_custom_call.1} parent=1 // pred_region
      _
    $region5: #{tpu_custom_call.1} parent=1 // pred_fallthru
      _
    // Predicated region
    $region6: #{tpu_custom_call.1} parent=1 // pred_check
      _
    $region7: #{tpu_custom_call.1} parent=1 // pred_check_branch
      %14 = sbr.rel (0) target = $region9
    $region8: #{tpu_custom_call.1} parent=1 // pred_region
      _
    $region9: #{tpu_custom_call.1} parent=1 // pred_fallthru
      _
    // Predicated region
    $region10: #{tpu_custom_call.1} parent=1 // pred_check
      _
    $region11: #{tpu_custom_call.1} parent=1 // pred_check_branch
      %16 = sbr.rel (0) target = $region13
    $region12: #{tpu_custom_call.1} parent=1 // pred_region
      %18 = vsyncadd [#allocation3], 0
      %s19 = sshll.u32 %s2, 4
      %s20 = int_to_ptr.hbm [resolvable:$true] %s19
      %s21 = sshll.u32 [#allocation2], 4
      %s22 = int_to_ptr.vmem [resolvable:$true] %s21
      %27 = dma.hbm_to_vmem [thread:$0]  %s20, 2048, %s22, [#allocation3], 128, 128, 8
    $region13: #{tpu_custom_call.1} parent=1 // pred_fallthru
      _
    // Predicated region
    $region14: #{tpu_custom_call.1} parent=1 // pred_check
      _
    $region15: #{tpu_custom_call.1} parent=1 // pred_check_branch
      %29 = sbr.rel (0) target = $region17
    $region16: #{tpu_custom_call.1} parent=1 // pred_region
      _
    $region17: #{tpu_custom_call.1} parent=1 // pred_fallthru
      _
    // Predicated region
    $region18: #{tpu_custom_call.1} parent=1 // pred_check
      _
    $region19: #{tpu_custom_call.1} parent=1 // pred_check_branch
      %31 = sbr.rel (0) target = $region21
    $region20: #{tpu_custom_call.1} parent=1 // pred_region
      %33 = dma.done [#allocation3], 2048
    $region21: #{tpu_custom_call.1} parent=1 // pred_fallthru
      _
    %v34 = vld [vmem:[%s0] sm:$0xff]
    %v35 = vld [vmem:[%s0 + $0x8] sm:$0xff]
    %v36 = vld [vmem:[%s0 + $0x10] sm:$0xff]
    %v37 = vld [vmem:[%s0 + $0x18] sm:$0xff]
    %v38 = vld [vmem:[#allocation2] sm:$0xff]
    %v39 = vld [vmem:[#allocation2 + $0x8] sm:$0xff]
    %v40 = vld [vmem:[#allocation2 + $0x10] sm:$0xff]
    %v41 = vld [vmem:[#allocation2 + $0x18] sm:$0xff]
    %v42 = vld [vmem:[#allocation2 + $0x20] sm:$0xff]
    %v43 = vld [vmem:[#allocation2 + $0x28] sm:$0xff]
    %v44 = vld [vmem:[#allocation2 + $0x30] sm:$0xff]
    %v45 = vld [vmem:[#allocation2 + $0x38] sm:$0xff]
    %v46 = vld [vmem:[#allocation2 + $0x40] sm:$0xff]
    %v47 = vld [vmem:[#allocation2 + $0x48] sm:$0xff]
    %v48 = vld [vmem:[#allocation2 + $0x50] sm:$0xff]
    %v49 = vld [vmem:[#allocation2 + $0x58] sm:$0xff]
    %v50 = vld [vmem:[#allocation2 + $0x60] sm:$0xff]
    %v51 = vld [vmem:[#allocation2 + $0x68] sm:$0xff]
    %v52 = vld [vmem:[#allocation2 + $0x70] sm:$0xff]
    %v53 = vld [vmem:[#allocation2 + $0x78] sm:$0xff]
    %54 = vmatpush.msra.mxu0 %v53
    %55 = vmatpush.msra.mxu0 %v52
    %56 = vmatpush.msra.mxu0 %v51
    %57 = vmatpush.msra.mxu0 %v50
    %58 = vmatpush.msra.mxu0 %v49
    %59 = vmatpush.msra.mxu0 %v48
    %60 = vmatpush.msra.mxu0 %v47
    %61 = vmatpush.msra.mxu0 %v46
    %62 = vmatpush.msra.mxu0 %v45
    %63 = vmatpush.msra.mxu0 %v44
    %64 = vmatpush.msra.mxu0 %v43
    %65 = vmatpush.msra.mxu0 %v42
    %66 = vmatpush.msra.mxu0 %v41
    %67 = vmatpush.msra.mxu0 %v40
    %68 = vmatpush.msra.mxu0 %v39
    %69 = vmatpush.msra.mxu0 %v38
    %70 = vmatmul.f32.gmra.mxu0 %v34
    %v71 = vpop.f32.mrf.mxu0
    %v72 = vadd.f32 0.0, %v71
    %73 = vmatmul.f32.gmra.mxu0 %v35
    %v74 = vpop.f32.mrf.mxu0
    %v75 = vadd.f32 0.0, %v74
    %76 = vmatmul.f32.gmra.mxu0 %v36
    %v77 = vpop.f32.mrf.mxu0
    %v78 = vadd.f32 0.0, %v77
    %79 = vmatmul.f32.gmra.mxu0 %v37
    %v80 = vpop.f32.mrf.mxu0
    %v81 = vadd.f32 0.0, %v80
    %82 = vdwg.mxu0
    %v83 = vxor.u32 %v72, 2147483648
    %v84 = vxor.u32 %v75, 2147483648
    %v85 = vxor.u32 %v78, 2147483648
    %v86 = vxor.u32 %v81, 2147483648
    %v87 = vmul.f32 %v83, 1.442695
    %v88 = vpow.pop %v87
    %v89 = vmul.f32 %v84, 1.442695
    %v90 = vpow.pop %v89
    %v91 = vmul.f32 %v85, 1.442695
    %v92 = vpow.pop %v91
    %v93 = vmul.f32 %v86, 1.442695
    %v94 = vpow.pop %v93
    %v95 = vadd.f32 %v88, 1.0
    %v96 = vadd.f32 %v90, 1.0
    %v97 = vadd.f32 %v92, 1.0
    %v98 = vadd.f32 %v94, 1.0
    %v99 = vrcp.pop %v95
    %v100 = vmul.f32 %v95, %v99
    %v101 = vsub.f32 1.0, %v100
    %v102 = vmul.f32 %v99, %v101
    %v103 = vadd.f32 %v99, %v102
    %vm104 = vweird.f32 %v95
    %vm105 = vweird.f32 %v99
    %vm106 = vmor %vm104, %vm105
    %v107 = vsel %vm106, %v99, %v103
    %v108 = vand.u32 2147483647, %v95
    %vm109 = vcmp.eq.f32.partialorder %v108, 8.507059e+37
    %v110 = vand.u32 %v95, 2147483648
    %v111 = vor.u32 1.1754944e-38, %v110
    %v112 = vsel %vm109, %v111, %v107
    %v113 = vmul.f32 1.0, %v112
    %v114 = vrcp.pop %v96
    %v115 = vmul.f32 %v96, %v114
    %v116 = vsub.f32 1.0, %v115
    %v117 = vmul.f32 %v114, %v116
    %v118 = vadd.f32 %v114, %v117
    %vm119 = vweird.f32 %v96
    %vm120 = vweird.f32 %v114
    %vm121 = vmor %vm119, %vm120
    %v122 = vsel %vm121, %v114, %v118
    %v123 = vand.u32 2147483647, %v96
    %vm124 = vcmp.eq.f32.partialorder %v123, 8.507059e+37
    %v125 = vand.u32 %v96, 2147483648
    %v126 = vor.u32 1.1754944e-38, %v125
    %v127 = vsel %vm124, %v126, %v122
    %v128 = vmul.f32 1.0, %v127
    %v129 = vrcp.pop %v97
    %v130 = vmul.f32 %v97, %v129
    %v131 = vsub.f32 1.0, %v130
    %v132 = vmul.f32 %v129, %v131
    %v133 = vadd.f32 %v129, %v132
    %vm134 = vweird.f32 %v97
    %vm135 = vweird.f32 %v129
    %vm136 = vmor %vm134, %vm135
    %v137 = vsel %vm136, %v129, %v133
    %v138 = vand.u32 2147483647, %v97
    %vm139 = vcmp.eq.f32.partialorder %v138, 8.507059e+37
    %v140 = vand.u32 %v97, 2147483648
    %v141 = vor.u32 1.1754944e-38, %v140
    %v142 = vsel %vm139, %v141, %v137
    %v143 = vmul.f32 1.0, %v142
    %v144 = vrcp.pop %v98
    %v145 = vmul.f32 %v98, %v144
    %v146 = vsub.f32 1.0, %v145
    %v147 = vmul.f32 %v144, %v146
    %v148 = vadd.f32 %v144, %v147
    %vm149 = vweird.f32 %v98
    %vm150 = vweird.f32 %v144
    %vm151 = vmor %vm149, %vm150
    %v152 = vsel %vm151, %v144, %v148
    %v153 = vand.u32 2147483647, %v98
    %vm154 = vcmp.eq.f32.partialorder %v153, 8.507059e+37
    %v155 = vand.u32 %v98, 2147483648
    %v156 = vor.u32 1.1754944e-38, %v155
    %v157 = vsel %vm154, %v156, %v152
    %v158 = vmul.f32 1.0, %v157
    %v159 = vsub.f32 1.0, %v113
    %v160 = vsub.f32 1.0, %v128
    %v161 = vsub.f32 1.0, %v143
    %v162 = vsub.f32 1.0, %v158
    %v163 = vmul.f32 %v159, %v159
    %v164 = vmul.f32 %v160, %v160
    %v165 = vmul.f32 %v161, %v161
    %v166 = vmul.f32 %v162, %v162
    %v167 = vmul.f32 %v163, 0.25
    %v168 = vmul.f32 %v164, 0.25
    %v169 = vmul.f32 %v165, 0.25
    %v170 = vmul.f32 %v166, 0.25
    %v171 = vadd.f32 %v113, 1e-08
    %v172 = vadd.f32 %v128, 1e-08
    %v173 = vadd.f32 %v143, 1e-08
    %v174 = vadd.f32 %v158, 1e-08
    %v175 = vlog2.pop %v171
    %v176 = vmul.f32 %v175, 0.6931472
    %v177 = vlog2.pop %v172
    %v178 = vmul.f32 %v177, 0.6931472
    %v179 = vlog2.pop %v173
    %v180 = vmul.f32 %v179, 0.6931472
    %v181 = vlog2.pop %v174
    %v182 = vmul.f32 %v181, 0.6931472
    %v183 = vsub.f32 0.0, %v176
    %v184 = vsub.f32 0.0, %v178
    %v185 = vsub.f32 0.0, %v180
    %v186 = vsub.f32 0.0, %v182
    %v187 = vmul.f32 %v167, %v183
    %v188 = vmul.f32 %v168, %v184
    %v189 = vmul.f32 %v169, %v185
    %v190 = vmul.f32 %v170, %v186
    %v191 = vmul.f32 %v113, %v113
    %v192 = vmul.f32 %v128, %v128
    %v193 = vmul.f32 %v143, %v143
    %v194 = vmul.f32 %v158, %v158
    %v195 = vmul.f32 %v191, 0.75
    %v196 = vmul.f32 %v192, 0.75
    %v197 = vmul.f32 %v193, 0.75
    %v198 = vmul.f32 %v194, 0.75
    %v199 = vadd.f32 %v159, 1e-08
    %v200 = vadd.f32 %v160, 1e-08
    %v201 = vadd.f32 %v161, 1e-08
    %v202 = vadd.f32 %v162, 1e-08
    %v203 = vlog2.pop %v199
    %v204 = vmul.f32 %v203, 0.6931472
    %v205 = vlog2.pop %v200
    %v206 = vmul.f32 %v205, 0.6931472
    %v207 = vlog2.pop %v201
    %v208 = vmul.f32 %v207, 0.6931472
    %v209 = vlog2.pop %v202
    %v210 = vmul.f32 %v209, 0.6931472
    %v211 = vsub.f32 0.0, %v204
    %v212 = vsub.f32 0.0, %v206
    %v213 = vsub.f32 0.0, %v208
    %v214 = vsub.f32 0.0, %v210
    %v215 = vmul.f32 %v195, %v211
    %v216 = vmul.f32 %v196, %v212
    %v217 = vmul.f32 %v197, %v213
    %v218 = vmul.f32 %v198, %v214
    %v219 = vsub.f32 %v187, %v215
    %v220 = vsub.f32 %v188, %v216
    %v221 = vsub.f32 %v189, %v217
    %v222 = vsub.f32 %v190, %v218
    %s223 = smul.u32 0, 32
    %s224 = scalar_lea.vmem %s1, %s223
    %v225 = vld [vmem:[%s224] sm:$0xff]
    %v226 = vld [vmem:[%s224 + $0x8] sm:$0xff]
    %v227 = vld [vmem:[%s224 + $0x10] sm:$0xff]
    %v228 = vld [vmem:[%s224 + $0x18] sm:$0xff]
    %v229 = vld [vmem:[%s3] sm:$0xf]
    %231 = vset.pattern.permute.xlu0 0
    %232 = vperm.xlu0 %231, %v225
    %v233 = vpop.permute.xlu0 %232
    %236 = vset.pattern.permute.xlu0 0
    %237 = vperm.xlu0 %236, %v226
    %v238 = vpop.permute.xlu0 %237
    %241 = vset.pattern.permute.xlu0 0
    %242 = vperm.xlu0 %241, %v227
    %v243 = vpop.permute.xlu0 %242
    %246 = vset.pattern.permute.xlu0 0
    %247 = vperm.xlu0 %246, %v228
    %v248 = vpop.permute.xlu0 %247
    %v250 = vperm.slane %v229, 0
    %v251 = vsub.f32 %v233, %v250
    %v252 = vsub.f32 %v238, %v250
    %v253 = vsub.f32 %v243, %v250
    %v254 = vsub.f32 %v248, %v250
    %v255 = vand.u32 2147483647, %v251
    %v256 = vand.u32 2147483647, %v252
    %v257 = vand.u32 2147483647, %v253
    %v258 = vand.u32 2147483647, %v254
    %259 = vset.pattern.permute.xlu0 1
    %260 = vperm.xlu0 %259, %v225
    %v261 = vpop.permute.xlu0 %260
    %263 = vset.pattern.permute.xlu0 1
    %264 = vperm.xlu0 %263, %v226
    %v265 = vpop.permute.xlu0 %264
    %267 = vset.pattern.permute.xlu0 1
    %268 = vperm.xlu0 %267, %v227
    %v269 = vpop.permute.xlu0 %268
    %271 = vset.pattern.permute.xlu0 1
    %272 = vperm.xlu0 %271, %v228
    %v273 = vpop.permute.xlu0 %272
    %v275 = vperm.slane %v229, 1
    %v276 = vsub.f32 %v261, %v275
    %v277 = vsub.f32 %v265, %v275
    %v278 = vsub.f32 %v269, %v275
    %v279 = vsub.f32 %v273, %v275
    %v280 = vand.u32 2147483647, %v276
    %v281 = vand.u32 2147483647, %v277
    %v282 = vand.u32 2147483647, %v278
    %v283 = vand.u32 2147483647, %v279
    %v284 = vadd.f32 %v255, %v280
    %v285 = vadd.f32 %v256, %v281
    %v286 = vadd.f32 %v257, %v282
    %v287 = vadd.f32 %v258, %v283
    %288 = vset.pattern.permute.xlu0 2
    %289 = vperm.xlu0 %288, %v225
    %v290 = vpop.permute.xlu0 %289
    %292 = vset.pattern.permute.xlu0 2
    %293 = vperm.xlu0 %292, %v226
    %v294 = vpop.permute.xlu0 %293
    %296 = vset.pattern.permute.xlu0 2
    %297 = vperm.xlu0 %296, %v227
    %v298 = vpop.permute.xlu0 %297
    %300 = vset.pattern.permute.xlu0 2
    %301 = vperm.xlu0 %300, %v228
    %v302 = vpop.permute.xlu0 %301
    %v304 = vperm.slane %v229, 2
    %v305 = vsub.f32 %v290, %v304
    %v306 = vsub.f32 %v294, %v304
    %v307 = vsub.f32 %v298, %v304
    %v308 = vsub.f32 %v302, %v304
    %v309 = vand.u32 2147483647, %v305
    %v310 = vand.u32 2147483647, %v306
    %v311 = vand.u32 2147483647, %v307
    %v312 = vand.u32 2147483647, %v308
    %v313 = vadd.f32 %v284, %v309
    %v314 = vadd.f32 %v285, %v310
    %v315 = vadd.f32 %v286, %v311
    %v316 = vadd.f32 %v287, %v312
    %317 = vset.pattern.permute.xlu0 3
    %318 = vperm.xlu0 %317, %v225
    %v319 = vpop.permute.xlu0 %318
    %321 = vset.pattern.permute.xlu0 3
    %322 = vperm.xlu0 %321, %v226
    %v323 = vpop.permute.xlu0 %322
    %325 = vset.pattern.permute.xlu0 3
    %326 = vperm.xlu0 %325, %v227
    %v327 = vpop.permute.xlu0 %326
    %329 = vset.pattern.permute.xlu0 3
    %330 = vperm.xlu0 %329, %v228
    %v331 = vpop.permute.xlu0 %330
    %v333 = vperm.slane %v229, 3
    %v334 = vsub.f32 %v319, %v333
    %v335 = vsub.f32 %v323, %v333
    %v336 = vsub.f32 %v327, %v333
    %v337 = vsub.f32 %v331, %v333
    %v338 = vand.u32 2147483647, %v334
    %v339 = vand.u32 2147483647, %v335
    %v340 = vand.u32 2147483647, %v336
    %v341 = vand.u32 2147483647, %v337
    %v342 = vadd.f32 %v313, %v338
    %v343 = vadd.f32 %v314, %v339
    %v344 = vadd.f32 %v315, %v340
    %v345 = vadd.f32 %v316, %v341
    %v346 = vadd.f32 %v219, %v342
    %v347 = vadd.f32 %v220, %v343
    %v348 = vadd.f32 %v221, %v344
    %v349 = vadd.f32 %v222, %v345
    %v350 = vmul.f32 %v225, 0.5
    %v351 = vmul.f32 %v226, 0.5
    %v352 = vmul.f32 %v227, 0.5
    %v353 = vmul.f32 %v228, 0.5
    %358 = vrot.lane.b32.xlu0 %v350, 126
    %v359 = vpop.permute.xlu0 %358
    %360 = vrot.lane.b32.xlu0 %v351, 126
    %v361 = vpop.permute.xlu0 %360
    %362 = vrot.lane.b32.xlu0 %v352, 126
    %v363 = vpop.permute.xlu0 %362
    %364 = vrot.lane.b32.xlu0 %v353, 126
    %v365 = vpop.permute.xlu0 %364
    %v370 = vsub.f32 %v225, %v359
    %v371 = vsub.f32 %v226, %v361
    %v372 = vsub.f32 %v227, %v363
    %v373 = vsub.f32 %v228, %v365
    %v374 = vadd.f32 %v225, %v359
    %v375 = vadd.f32 %v226, %v361
    %v376 = vadd.f32 %v227, %v363
    %v377 = vadd.f32 %v228, %v365
    %v378 = vmul.f32 %v229, 0.5
    %v380 = vrot.slane %v378, 2
    %v382 = vsub.f32 %v229, %v380
    %v383 = vadd.f32 %v229, %v380
    %385 = vset.pattern.permute.xlu0 0
    %386 = vperm.xlu0 %385, %v374
    %v387 = vpop.permute.xlu0 %386
    %390 = vset.pattern.permute.xlu0 0
    %391 = vperm.xlu0 %390, %v375
    %v392 = vpop.permute.xlu0 %391
    %395 = vset.pattern.permute.xlu0 0
    %396 = vperm.xlu0 %395, %v376
    %v397 = vpop.permute.xlu0 %396
    %400 = vset.pattern.permute.xlu0 0
    %401 = vperm.xlu0 %400, %v377
    %v402 = vpop.permute.xlu0 %401
    %v404 = vperm.slane %v383, 0
    %v405 = vmin.f32 %v387, %v404
    %v406 = vmin.f32 %v392, %v404
    %v407 = vmin.f32 %v397, %v404
    %v408 = vmin.f32 %v402, %v404
    %410 = vset.pattern.permute.xlu0 0
    %411 = vperm.xlu0 %410, %v370
    %v412 = vpop.permute.xlu0 %411
    %415 = vset.pattern.permute.xlu0 0
    %416 = vperm.xlu0 %415, %v371
    %v417 = vpop.permute.xlu0 %416
    %420 = vset.pattern.permute.xlu0 0
    %421 = vperm.xlu0 %420, %v372
    %v422 = vpop.permute.xlu0 %421
    %425 = vset.pattern.permute.xlu0 0
    %426 = vperm.xlu0 %425, %v373
    %v427 = vpop.permute.xlu0 %426
    %v429 = vperm.slane %v382, 0
    %v430 = vmax.f32 %v412, %v429
    %v431 = vmax.f32 %v417, %v429
    %v432 = vmax.f32 %v422, %v429
    %v433 = vmax.f32 %v427, %v429
    %v434 = vsub.f32 %v405, %v430
    %v435 = vsub.f32 %v406, %v431
    %v436 = vsub.f32 %v407, %v432
    %v437 = vsub.f32 %v408, %v433
    %v438 = vmax.f32 %v434, 0.0
    %v439 = vmax.f32 %v435, 0.0
    %v440 = vmax.f32 %v436, 0.0
    %v441 = vmax.f32 %v437, 0.0
    %442 = vset.pattern.permute.xlu0 1
    %443 = vperm.xlu0 %442, %v374
    %v444 = vpop.permute.xlu0 %443
    %446 = vset.pattern.permute.xlu0 1
    %447 = vperm.xlu0 %446, %v375
    %v448 = vpop.permute.xlu0 %447
    %450 = vset.pattern.permute.xlu0 1
    %451 = vperm.xlu0 %450, %v376
    %v452 = vpop.permute.xlu0 %451
    %454 = vset.pattern.permute.xlu0 1
    %455 = vperm.xlu0 %454, %v377
    %v456 = vpop.permute.xlu0 %455
    %v458 = vperm.slane %v383, 1
    %v459 = vmin.f32 %v444, %v458
    %v460 = vmin.f32 %v448, %v458
    %v461 = vmin.f32 %v452, %v458
    %v462 = vmin.f32 %v456, %v458
    %463 = vset.pattern.permute.xlu0 1
    %464 = vperm.xlu0 %463, %v370
    %v465 = vpop.permute.xlu0 %464
    %467 = vset.pattern.permute.xlu0 1
    %468 = vperm.xlu0 %467, %v371
    %v469 = vpop.permute.xlu0 %468
    %471 = vset.pattern.permute.xlu0 1
    %472 = vperm.xlu0 %471, %v372
    %v473 = vpop.permute.xlu0 %472
    %475 = vset.pattern.permute.xlu0 1
    %476 = vperm.xlu0 %475, %v373
    %v477 = vpop.permute.xlu0 %476
    %v479 = vperm.slane %v382, 1
    %v480 = vmax.f32 %v465, %v479
    %v481 = vmax.f32 %v469, %v479
    %v482 = vmax.f32 %v473, %v479
    %v483 = vmax.f32 %v477, %v479
    %v484 = vsub.f32 %v459, %v480
    %v485 = vsub.f32 %v460, %v481
    %v486 = vsub.f32 %v461, %v482
    %v487 = vsub.f32 %v462, %v483
    %v488 = vmax.f32 %v484, 0.0
    %v489 = vmax.f32 %v485, 0.0
    %v490 = vmax.f32 %v486, 0.0
    %v491 = vmax.f32 %v487, 0.0
    %v492 = vmul.f32 %v438, %v488
    %v493 = vmul.f32 %v439, %v489
    %v494 = vmul.f32 %v440, %v490
    %v495 = vmul.f32 %v441, %v491
    %v496 = vsub.f32 %v374, %v370
    %v497 = vsub.f32 %v375, %v371
    %v498 = vsub.f32 %v376, %v372
    %v499 = vsub.f32 %v377, %v373
    %504 = vrot.lane.b32.xlu0 %v496, 127
    %v505 = vpop.permute.xlu0 %504
    %506 = vrot.lane.b32.xlu0 %v497, 127
    %v507 = vpop.permute.xlu0 %506
    %508 = vrot.lane.b32.xlu0 %v498, 127
    %v509 = vpop.permute.xlu0 %508
    %510 = vrot.lane.b32.xlu0 %v499, 127
    %v511 = vpop.permute.xlu0 %510
    %v516 = vmul.f32 %v496, %v505
    %v517 = vmul.f32 %v497, %v507
    %v518 = vmul.f32 %v498, %v509
    %v519 = vmul.f32 %v499, %v511
    %v520 = vsub.f32 %v383, %v382
    %v522 = vrot.slane %v520, 1
    %v524 = vmul.f32 %v520, %v522
    %526 = vset.pattern.permute.xlu0 0
    %527 = vperm.xlu0 %526, %v516
    %v528 = vpop.permute.xlu0 %527
    %531 = vset.pattern.permute.xlu0 0
    %532 = vperm.xlu0 %531, %v517
    %v533 = vpop.permute.xlu0 %532
    %536 = vset.pattern.permute.xlu0 0
    %537 = vperm.xlu0 %536, %v518
    %v538 = vpop.permute.xlu0 %537
    %541 = vset.pattern.permute.xlu0 0
    %542 = vperm.xlu0 %541, %v519
    %v543 = vpop.permute.xlu0 %542
    %v545 = vperm.slane %v524, 0
    %v546 = vadd.f32 %v528, %v545
    %v547 = vadd.f32 %v533, %v545
    %v548 = vadd.f32 %v538, %v545
    %v549 = vadd.f32 %v543, %v545
    %v550 = vsub.f32 %v546, %v492
    %v551 = vsub.f32 %v547, %v493
    %v552 = vsub.f32 %v548, %v494
    %v553 = vsub.f32 %v549, %v495
    %v554 = vmax.f32 %v387, %v404
    %v555 = vmax.f32 %v392, %v404
    %v556 = vmax.f32 %v397, %v404
    %v557 = vmax.f32 %v402, %v404
    %v558 = vmin.f32 %v412, %v429
    %v559 = vmin.f32 %v417, %v429
    %v560 = vmin.f32 %v422, %v429
    %v561 = vmin.f32 %v427, %v429
    %v562 = vsub.f32 %v554, %v558
    %v563 = vsub.f32 %v555, %v559
    %v564 = vsub.f32 %v556, %v560
    %v565 = vsub.f32 %v557, %v561
    %v566 = vmax.f32 %v444, %v458
    %v567 = vmax.f32 %v448, %v458
    %v568 = vmax.f32 %v452, %v458
    %v569 = vmax.f32 %v456, %v458
    %v570 = vmin.f32 %v465, %v479
    %v571 = vmin.f32 %v469, %v479
    %v572 = vmin.f32 %v473, %v479
    %v573 = vmin.f32 %v477, %v479
    %v574 = vsub.f32 %v566, %v570
    %v575 = vsub.f32 %v567, %v571
    %v576 = vsub.f32 %v568, %v572
    %v577 = vsub.f32 %v569, %v573
    %v578 = vmul.f32 %v562, %v574
    %v579 = vmul.f32 %v563, %v575
    %v580 = vmul.f32 %v564, %v576
    %v581 = vmul.f32 %v565, %v577
    %v582 = vmax.f32 %v550, 1e-09
    %v583 = vmax.f32 %v551, 1e-09
    %v584 = vmax.f32 %v552, 1e-09
    %v585 = vmax.f32 %v553, 1e-09
    %v586 = vrcp.pop %v582
    %v587 = vrcp.pop %v583
    %v588 = vrcp.pop %v584
    %v589 = vrcp.pop %v585
    %v590 = vmul.f32 %v492, %v586
    %v591 = vmul.f32 %v493, %v587
    %v592 = vmul.f32 %v494, %v588
    %v593 = vmul.f32 %v495, %v589
    %v594 = vsub.f32 %v578, %v550
    %v595 = vsub.f32 %v579, %v551
    %v596 = vsub.f32 %v580, %v552
    %v597 = vsub.f32 %v581, %v553
    %v598 = vmax.f32 %v578, 1e-09
    %v599 = vmax.f32 %v579, 1e-09
    %v600 = vmax.f32 %v580, 1e-09
    %v601 = vmax.f32 %v581, 1e-09
    %v602 = vrcp.pop %v598
    %v603 = vrcp.pop %v599
    %v604 = vrcp.pop %v600
    %v605 = vrcp.pop %v601
    %v606 = vmul.f32 %v594, %v602
    %v607 = vmul.f32 %v595, %v603
    %v608 = vmul.f32 %v596, %v604
    %v609 = vmul.f32 %v597, %v605
    %v610 = vsub.f32 %v590, %v606
    %v611 = vsub.f32 %v591, %v607
    %v612 = vsub.f32 %v592, %v608
    %v613 = vsub.f32 %v593, %v609
    %v614 = vsub.f32 %v346, %v610
    %v615 = vsub.f32 %v347, %v611
    %v616 = vsub.f32 %v348, %v612
    %v617 = vsub.f32 %v349, %v613
    %618 = vst [vmem:[#allocation5] sm:$0xff] %v614
    %619 = vst [vmem:[#allocation5 + $0x8] sm:$0xff] %v615
    %620 = vst [vmem:[#allocation5 + $0x10] sm:$0xff] %v616
    %621 = vst [vmem:[#allocation5 + $0x18] sm:$0xff] %v617
    // Predicated region
    $region22: #{tpu_custom_call.1} parent=1 // pred_check
      _
    $region23: #{tpu_custom_call.1} parent=1 // pred_check_branch
      %623 = sbr.rel (0) target = $region25
    $region24: #{tpu_custom_call.1} parent=1 // pred_region
      %625 = vsyncadd [#allocation4], 0
      %s626 = sshll.u32 [#allocation5], 4
      %s627 = int_to_ptr.vmem [resolvable:$true] %s626
      %s628 = sshll.u32 %s4, 4
      %s629 = int_to_ptr.hbm [resolvable:$true] %s628
      %634 = dma.vmem_to_hbm [thread:$0]  %s627, 512, %s629, [#allocation4], 128, 128, 8
    $region25: #{tpu_custom_call.1} parent=1 // pred_fallthru
      _
    // Predicated region
    $region26: #{tpu_custom_call.1} parent=1 // pred_check
      _
    $region27: #{tpu_custom_call.1} parent=1 // pred_check_branch
      %636 = sbr.rel (0) target = $region29
    $region28: #{tpu_custom_call.1} parent=1 // pred_region
      %638 = dma.done [#allocation4], 512
    $region29: #{tpu_custom_call.1} parent=1 // pred_fallthru
      _
    %639 = vsyncpa [#allocation3], 1
    %640 = vsyncpa [#allocation4], 1

</llo_original>
